<compile_context>
chip_gen: v5e
topology: v5e:2x2
jax: 0.10.0
libtpu: 0.0.40
codegen_flags: <defaults>
</compile_context>

<pallas_src>
import functools

import jax
import jax.numpy as jnp
from jax.experimental import pallas as pl
from jax.experimental.pallas import tpu as pltpu


def _ce_kernel(labels_ref, logits_ref, loss_ref, acc_ref, *,
               factor, num_classes, num_parts, exact_argmax):
    """Cross-entropy + top-1 accuracy for one tile of parts.

    labels_ref : (n, 1)        int32 ground-truth labels (shared across steps)
    logits_ref : (n, PT, c)    logits tile in native (batch, part, class) layout
    loss_ref   : (1, 1, 1)     sum of per-(sample, part) CE loss for this tile
    acc_ref    : (1, 1, 1)     count of correct top-1 predictions for this tile
    """
    n, pt, c = logits_ref.shape
    part0 = pl.program_id(0) * pt

    x = logits_ref[...]                                     # native dtype

    # (1, 1, c) class-index iota; broadcast instead of materializing an
    # (n, pt, c) int32 tensor.
    col = jax.lax.broadcasted_iota(jnp.int32, (1, 1, c), 2)

    if num_classes < c:
        # exclude padded classes from the max / LSE / accuracy with -inf
        neg_inf = jnp.asarray(-jnp.inf, dtype=x.dtype)
        xm = jnp.where(col < num_classes, x, neg_inf)
    else:
        xm = x

    # single class-axis max, shared by the LSE and the accuracy check
    m_x = jnp.max(xm, axis=-1, keepdims=True)               # (n, pt, 1)

    # numerically stable log-sum-exp of factor*x over valid classes.
    # xm is already masked (-inf -> exp 0), so no second mask is needed;
    # only the exp path is upcast to f32.
    z = (xm.astype(jnp.float32) - m_x.astype(jnp.float32)) * factor
    lse = (jnp.log(jnp.sum(jnp.exp(z), axis=-1, keepdims=True))
           + factor * m_x.astype(jnp.float32))               # (n, pt, 1)

    # target logit gathered with the integer labels (no one-hot in HBM)
    lab3 = labels_ref[...][:, :, None]                       # (n, 1, 1) int32
    tgt = col == lab3                                         # (n, 1, c)
    zero = jnp.zeros((), dtype=x.dtype)
    x_tgt = jnp.sum(jnp.where(tgt, x, zero), axis=-1, keepdims=True)

    loss = lse - factor * x_tgt.astype(jnp.float32)           # (n, pt, 1)

    if exact_argmax:
        # first-occurrence argmax over valid classes (torch tie-break parity)
        pred = jnp.min(jnp.where(xm == m_x, col, c), axis=-1, keepdims=True)
        correct = (pred == lab3).astype(jnp.float32)
    else:
        # fused check: the label's logit attains the class max.  Differs from
        # torch argmax only on exact float ties at distinct class indices.
        correct = (x_tgt == m_x).astype(jnp.float32)          # (n, pt, 1)

    # mask grid-padded parts (num_parts % pt != 0); where() also drops any
    # NaN/Inf coming from padded block contents.
    prt = part0 + jax.lax.broadcasted_iota(jnp.int32, (1, pt, 1), 1)
    ok = prt < num_parts
    loss = jnp.where(ok, loss, 0.0)
    correct = jnp.where(ok, correct, 0.0)

    # in-kernel reduction: one scalar loss-sum / correct-count per grid step
    loss_ref[...] = jnp.sum(jnp.sum(loss, axis=1, keepdims=True),
                            axis=0, keepdims=True)
    acc_ref[...] = jnp.sum(jnp.sum(correct, axis=1, keepdims=True),
                           axis=0, keepdims=True)


def _vmem_capacity_bytes():
    """Physical VMEM per TensorCore (128 MiB v5e/v6e, 64 MiB v7x)."""
    try:
        info = pltpu.get_tpu_info()
        cap = getattr(info, "vmem_capacity_bytes", None)
        if cap:
            return int(cap)
    except Exception:
        pass
    return 128 * 1024 * 1024


def _choose_tiling(n, p, c, itemsize):
    """Pick the part tile, grid length and the scoped-VMEM limit.

    Working-set model per streamed element:
      2 * itemsize   double-buffered logits block
      itemsize       masked copy (xm) when num_classes < c (always budgeted)
      ~8 B           f32 exp-path temporaries (z / exp(z))
    The budget is generation-aware and the derived limit is passed explicitly
    via vmem_limit_bytes, so the per-generation default scoped limits
    (16 MiB v5e, 32 MiB v6e/v7x) never bind.
    """
    vmem_cap = _vmem_capacity_bytes()
    per_elem = 3 * itemsize + 8
    working_budget = min(int(vmem_cap * 0.45), 48 * 1024 * 1024)
    fit = max(1, working_budget // max(1, n * c * per_elem))

    if p <= 8:
        p_tile = p                       # whole parts axis; smallest legal tile
    else:
        # keep >= 2 grid steps so both v7x TensorCores get work on the
        # "parallel" axis; the tile must be a multiple of 8 (sublane rule).
        split_cap = ((-(-p // 2)) + 7) // 8 * 8
        p_tile = min(int(fit), split_cap, p)
        p_tile = max(8, (p_tile // 8) * 8)

    num_steps = -(-p // p_tile)
    block_bytes = n * p_tile * c * per_elem
    vmem_limit = int(min(vmem_cap * 3 // 4,
                         max(32 * 1024 * 1024, 2 * block_bytes)))
    return p_tile, num_steps, vmem_limit


def cross_entropy_loss_forward(logits, labels, *, num_classes, factor=16,
                               epsilon=0.1, exact_argmax=False):
    """JAX/Pallas equivalent of CrossEntropyLoss.forward (non-distributed).

    logits : (n, p, c) float array ("results['logits']"), native layout
    labels : (n,)      int   array ("targets['label']")
    """
    # `epsilon` is unused, matching the reference forward().
    n, p, c = logits.shape
    assert num_classes > 0 and c >= num_classes

    labels2d = labels.astype(jnp.int32).reshape(n, 1)
    itemsize = jnp.dtype(logits.dtype).itemsize
    p_tile, num_steps, vmem_limit = _choose_tiling(n, p, c, itemsize)

    # TODO(synk): for very large num_classes (block > VMEM budget even at
    # p_tile=8), add a class-axis grid dimension with an online log-sum-exp
    # accumulator instead of shrinking the part tile.
    # TODO(synk): for tiny class counts (c << 128) a relayout mapping n to the
    # lane axis would improve vreg occupancy of the class reductions.

    kernel = functools.partial(
        _ce_kernel,
        factor=float(factor),
        num_classes=int(num_classes),
        num_parts=int(p),
        exact_argmax=bool(exact_argmax),
    )

    cost = pl.CostEstimate(
        flops=int(10 * n * p * c),
        transcendentals=int(n * p * c + n * p),
        bytes_accessed=int(n * p * c * itemsize + n * 4 + 2 * num_steps * 4),
    )

    loss_sums, correct_sums = pl.pallas_call(
        kernel,
        out_shape=(
            jax.ShapeDtypeStruct((num_steps, 1, 1), jnp.float32),
            jax.ShapeDtypeStruct((num_steps, 1, 1), jnp.float32),
        ),
        grid=(num_steps,),
        in_specs=[
            pl.BlockSpec((n, 1), lambda i: (0, 0)),              # int labels
            pl.BlockSpec((n, p_tile, c), lambda i: (0, i, 0)),   # logits, native
        ],
        out_specs=(
            pl.BlockSpec((1, 1, 1), lambda i: (i, 0, 0)),
            pl.BlockSpec((1, 1, 1), lambda i: (i, 0, 0)),
        ),
        compiler_params=pltpu.CompilerParams(
            dimension_semantics=("parallel",),
            vmem_limit_bytes=vmem_limit,
        ),
        cost_estimate=cost,
    )(labels2d, logits)

    denom = jnp.float32(n * p)
    loss = jnp.sum(loss_sums) / denom            # mean over parts and batch
    accu = jnp.sum(correct_sums) / denom

    world_size = 1  # non-distributed path (dist=False)
    loss_info = {"ce_loss": loss, "ACC@R1": accu}
    return loss * world_size, loss_info


if __name__ == "__main__":
    def reference(logits, labels, num_classes, factor):
        # pure-JAX mirror of the torch module
        emb = jnp.transpose(
            logits[:, :, :num_classes].astype(jnp.float32), (1, 0, 2))
        log_probs = jax.nn.log_softmax(emb * factor, axis=-1)
        onehot = jax.nn.one_hot(labels, num_classes, dtype=jnp.float32)[None]
        loss = jnp.mean(jnp.mean(jnp.sum(-onehot * log_probs, -1), -1))
        accu = jnp.mean(
            (jnp.argmax(emb, -1) == labels[None]).astype(jnp.float32))
        return loss, accu

    key = jax.random.PRNGKey(0)
    factor = 16
    cases = [
        # (n, p, c, num_classes) — small shapes consistent with the module
        (8, 2, 40, 32),    # c > K  -> in-kernel class mask, single grid step
        (8, 24, 32, 32),   # c == K -> unmasked path, multi-step grid + padding
    ]
    for idx, (n, p, c, K) in enumerate(cases):
        key, k_logits, k_labels = jax.random.split(key, 3)
        logits = jax.random.normal(k_logits, (n, p, c), dtype=jnp.float32)
        labels = jax.random.randint(k_labels, (n,), 0, K, dtype=jnp.int32)

        loss, info = cross_entropy_loss_forward(
            logits, labels, num_classes=K, factor=factor)
        loss = jax.block_until_ready(loss)
        accu = jax.block_until_ready(info["ACC@R1"])

        loss_ref, accu_ref = reference(logits, labels, K, factor)
        assert jnp.allclose(loss, loss_ref, rtol=1e-4, atol=1e-4), (
            idx, float(loss), float(loss_ref))
        assert jnp.allclose(accu, accu_ref, rtol=1e-6, atol=1e-6), (
            idx, float(accu), float(accu_ref))

    print("KERNEL_OK")
</pallas_src>

<mosaic_0001>
module attributes {stable_mosaic.version = 11 : i64} {
  func.func @_ce_kernel(%arg0: i32, %arg1: memref<8x1xi32, #tpu.memory_space<vmem>>, %arg2: memref<8x2x40xf32, #tpu.memory_space<vmem>>, %arg3: memref<1x1x1xf32, #tpu.memory_space<vmem>>, %arg4: memref<1x1x1xf32, #tpu.memory_space<vmem>>) attributes {dimension_semantics = [#tpu.dimension_semantics<parallel>], iteration_bounds = array<i64: 1>, scalar_prefetch = 0 : i64, scratch_operands = 0 : i64, tpu.core_type = #tpu.core_type<tc>, window_params = [{pipeline_mode = #tpu.pipeline_mode<synchronous>, transform_indices = @transform_0, window_bounds = array<i64: 8, 1>}, {transform_indices = @transform_1, window_bounds = array<i64: 8, 2, 40>}, {transform_indices = @transform_2, window_bounds = array<i64: 1, 1, 1>}, {transform_indices = @transform_3, window_bounds = array<i64: 1, 1, 1>}]} {
    %c2_i32 = arith.constant 2 : i32
    %0 = arith.muli %arg0, %c2_i32 : i32
    %c0 = arith.constant 0 : index
    %c0_0 = arith.constant 0 : index
    %c0_1 = arith.constant 0 : index
    %1 = vector.load %arg2[%c0, %c0_0, %c0_1] : memref<8x2x40xf32, #tpu.memory_space<vmem>>, vector<8x2x40xf32>
    %2 = tpu.iota {dimensions = array<i32: 2>} : vector<1x1x40xi32>
    %c32_i32 = arith.constant 32 : i32
    %3 = vector.broadcast %c32_i32 : i32 to vector<1x1x40xi32>
    %4 = arith.cmpi slt, %2, %3 : vector<1x1x40xi32>
    %cst = arith.constant 0xFF800000 : f32
    %5 = vector.shape_cast %4 : vector<1x1x40xi1> to vector<1x1x40xi1>
    %6 = vector.broadcast %5 : vector<1x1x40xi1> to vector<8x2x40xi1>
    %7 = vector.broadcast %cst : f32 to vector<8x2x40xf32>
    %8 = arith.select %6, %1, %7 : vector<8x2x40xi1>, vector<8x2x40xf32>
    %cst_2 = arith.constant dense<0xFF800000> : vector<8x2xf32>
    %9 = vector.multi_reduction <maximumf>, %8, %cst_2 [2] : vector<8x2x40xf32> to vector<8x2xf32>
    %10 = vector.shape_cast %9 : vector<8x2xf32> to vector<8x2x1xf32>
    %11 = vector.broadcast %10 : vector<8x2x1xf32> to vector<8x2x40xf32>
    %12 = arith.subf %8, %11 : vector<8x2x40xf32>
    %cst_3 = arith.constant 1.600000e+01 : f32
    %13 = vector.broadcast %cst_3 : f32 to vector<8x2x40xf32>
    %14 = arith.mulf %12, %13 : vector<8x2x40xf32>
    %15 = math.exp %14 : vector<8x2x40xf32>
    %cst_4 = arith.constant dense<0.000000e+00> : vector<8x2xf32>
    %16 = vector.multi_reduction <add>, %15, %cst_4 [2] : vector<8x2x40xf32> to vector<8x2xf32>
    %17 = vector.shape_cast %16 : vector<8x2xf32> to vector<8x2x1xf32>
    %18 = math.log %17 : vector<8x2x1xf32>
    %cst_5 = arith.constant 1.600000e+01 : f32
    %19 = vector.broadcast %cst_5 : f32 to vector<8x2x1xf32>
    %20 = arith.mulf %19, %10 : vector<8x2x1xf32>
    %21 = arith.addf %18, %20 : vector<8x2x1xf32>
    %c0_6 = arith.constant 0 : index
    %c0_7 = arith.constant 0 : index
    %22 = vector.load %arg1[%c0_6, %c0_7] : memref<8x1xi32, #tpu.memory_space<vmem>>, vector<8x1xi32>
    %23 = vector.shape_cast %22 : vector<8x1xi32> to vector<8x1x1xi32>
    %24 = vector.broadcast %2 : vector<1x1x40xi32> to vector<8x1x40xi32>
    %25 = vector.broadcast %23 : vector<8x1x1xi32> to vector<8x1x40xi32>
    %26 = arith.cmpi eq, %24, %25 : vector<8x1x40xi32>
    %cst_8 = arith.constant 0.000000e+00 : f32
    %27 = vector.shape_cast %26 : vector<8x1x40xi1> to vector<8x1x40xi1>
    %28 = vector.broadcast %27 : vector<8x1x40xi1> to vector<8x2x40xi1>
    %29 = vector.broadcast %cst_8 : f32 to vector<8x2x40xf32>
    %30 = arith.select %28, %1, %29 : vector<8x2x40xi1>, vector<8x2x40xf32>
    %cst_9 = arith.constant dense<0.000000e+00> : vector<8x2xf32>
    %31 = vector.multi_reduction <add>, %30, %cst_9 [2] : vector<8x2x40xf32> to vector<8x2xf32>
    %32 = vector.shape_cast %31 : vector<8x2xf32> to vector<8x2x1xf32>
    %cst_10 = arith.constant 1.600000e+01 : f32
    %33 = vector.broadcast %cst_10 : f32 to vector<8x2x1xf32>
    %34 = arith.mulf %33, %32 : vector<8x2x1xf32>
    %35 = arith.subf %21, %34 : vector<8x2x1xf32>
    %36 = arith.cmpf oeq, %32, %10 : vector<8x2x1xf32>
    %37 = arith.extui %36 : vector<8x2x1xi1> to vector<8x2x1xi32>
    %38 = arith.sitofp %37 : vector<8x2x1xi32> to vector<8x2x1xf32>
    %39 = tpu.iota {dimensions = array<i32: 1>} : vector<1x2x1xi32>
    %40 = vector.broadcast %0 : i32 to vector<1x2x1xi32>
    %41 = arith.addi %40, %39 : vector<1x2x1xi32>
    %c2_i32_11 = arith.constant 2 : i32
    %42 = vector.broadcast %c2_i32_11 : i32 to vector<1x2x1xi32>
    %43 = arith.cmpi slt, %41, %42 : vector<1x2x1xi32>
    %cst_12 = arith.constant 0.000000e+00 : f32
    %44 = vector.shape_cast %43 : vector<1x2x1xi1> to vector<1x2x1xi1>
    %45 = vector.broadcast %44 : vector<1x2x1xi1> to vector<8x2x1xi1>
    %46 = vector.broadcast %cst_12 : f32 to vector<8x2x1xf32>
    %47 = arith.select %45, %35, %46 : vector<8x2x1xi1>, vector<8x2x1xf32>
    %cst_13 = arith.constant 0.000000e+00 : f32
    %48 = vector.shape_cast %43 : vector<1x2x1xi1> to vector<1x2x1xi1>
    %49 = vector.broadcast %48 : vector<1x2x1xi1> to vector<8x2x1xi1>
    %50 = vector.broadcast %cst_13 : f32 to vector<8x2x1xf32>
    %51 = arith.select %49, %38, %50 : vector<8x2x1xi1>, vector<8x2x1xf32>
    %cst_14 = arith.constant dense<0.000000e+00> : vector<8x1xf32>
    %52 = vector.multi_reduction <add>, %47, %cst_14 [1] : vector<8x2x1xf32> to vector<8x1xf32>
    %53 = vector.shape_cast %52 : vector<8x1xf32> to vector<8x1x1xf32>
    %cst_15 = arith.constant dense<0.000000e+00> : vector<1x1xf32>
    %54 = vector.multi_reduction <add>, %53, %cst_15 [0] : vector<8x1x1xf32> to vector<1x1xf32>
    %55 = vector.shape_cast %54 : vector<1x1xf32> to vector<1x1x1xf32>
    %c0_16 = arith.constant 0 : index
    %c0_17 = arith.constant 0 : index
    %c0_18 = arith.constant 0 : index
    %56 = vector.load %arg3[%c0_16, %c0_17, %c0_18] : memref<1x1x1xf32, #tpu.memory_space<vmem>>, vector<1x1x1xf32>
    tpu.vector_store %arg3[%c0_16, %c0_17, %c0_18], %55 {strides = array<i32>} : memref<1x1x1xf32, #tpu.memory_space<vmem>>, vector<1x1x1xf32>,
    %cst_19 = arith.constant dense<0.000000e+00> : vector<8x1xf32>
    %57 = vector.multi_reduction <add>, %51, %cst_19 [1] : vector<8x2x1xf32> to vector<8x1xf32>
    %58 = vector.shape_cast %57 : vector<8x1xf32> to vector<8x1x1xf32>
    %cst_20 = arith.constant dense<0.000000e+00> : vector<1x1xf32>
    %59 = vector.multi_reduction <add>, %58, %cst_20 [0] : vector<8x1x1xf32> to vector<1x1xf32>
    %60 = vector.shape_cast %59 : vector<1x1xf32> to vector<1x1x1xf32>
    %c0_21 = arith.constant 0 : index
    %c0_22 = arith.constant 0 : index
    %c0_23 = arith.constant 0 : index
    %61 = vector.load %arg4[%c0_21, %c0_22, %c0_23] : memref<1x1x1xf32, #tpu.memory_space<vmem>>, vector<1x1x1xf32>
    tpu.vector_store %arg4[%c0_21, %c0_22, %c0_23], %60 {strides = array<i32>} : memref<1x1x1xf32, #tpu.memory_space<vmem>>, vector<1x1x1xf32>,
    return
  }
  func.func @transform_0(%arg0: i32) -> (i32, i32) {
    %c0_i32 = arith.constant 0 : i32
    %c0_i32_0 = arith.constant 0 : i32
    %c0_i32_1 = arith.constant 0 : i32
    return %c0_i32, %c0_i32_0 : i32, i32
  }
  func.func @transform_1(%arg0: i32) -> (i32, i32, i32) {
    %c0_i32 = arith.constant 0 : i32
    %c0_i32_0 = arith.constant 0 : i32
    %c0_i32_1 = arith.constant 0 : i32
    return %c0_i32, %arg0, %c0_i32_0 : i32, i32, i32
  }
  func.func @transform_2(%arg0: i32) -> (i32, i32, i32) {
    %c0_i32 = arith.constant 0 : i32
    %c0_i32_0 = arith.constant 0 : i32
    %c0_i32_1 = arith.constant 0 : i32
    return %arg0, %c0_i32, %c0_i32_0 : i32, i32, i32
  }
  func.func @transform_3(%arg0: i32) -> (i32, i32, i32) {
    %c0_i32 = arith.constant 0 : i32
    %c0_i32_0 = arith.constant 0 : i32
    %c0_i32_1 = arith.constant 0 : i32
    return %arg0, %c0_i32, %c0_i32_0 : i32, i32, i32
  }
}

</mosaic_0001>

<llo_original>
// kernel: tpu_custom_call.1
$region0: #{tpu_custom_call.1}
  #allocation0 [shape = 'u32[]', space=smem, size = 0x4, offset = 0x4, fixed_abs, tag = 'smem constant byte address 0x4 - core index']
  #allocation1 [shape = 'u32[72,128]{1,0:T(1,128)}', space=vmem, size = 0x9000, scoped, tag = 'internal scratch']
  %s0 = inlined_call_operand.vmem [shape: s32[8,1], index: 0, kind: input, shape index: {}]
  %s1 = inlined_call_operand.hbm [shape: f32[8,2,40], index: 1, kind: input, shape index: {}]
  %s2 = inlined_call_operand.hbm [shape: f32[1,1,1], index: 2, kind: output, shape index: {0}]
  %s3 = inlined_call_operand.hbm [shape: f32[1,1,1], index: 3, kind: output, shape index: {1}]
  %4 = xla_tuple %s2, %s3
  %s5 = sld [smem:[#allocation0]]
  $region30: #{tpu_custom_call.1} parent=0
    _
  %s7 = ssub.s32 1, %s5
  %s8 = scalar_select 0, %s7, %s5
  $region1: #{tpu_custom_call.1} parent=0
    #allocation2 [shape = 'u8[8192]{0}', space=vmem, size = 0x2000, scoped, tag = 'input window, operand 1, single buffered']
    #allocation3 [shape = 's32[1]{0}', space=sflag, size = 0x4, scoped, tag = 'scoped memory for tpu_custom_call.1']
    #allocation4 [shape = 's32[1]{0}', space=sflag, size = 0x4, scoped, tag = 'scoped memory for tpu_custom_call.1']
    #allocation5 [shape = 'u8[512]{0}', space=vmem, size = 0x400, scoped, tag = 'output window, operand 0, single buffered']
    #allocation6 [shape = 'u8[512]{0}', space=vmem, size = 0x400, scoped, tag = 'output window, operand 1, single buffered']
    #allocation7 [shape = 's32[1]{0}', space=sflag, size = 0x4, scoped, tag = 'scoped memory for tpu_custom_call.1']
    %9 = vsyncpa [#allocation3], 0
    %10 = vsyncpa [#allocation4], 0
    %11 = vsyncpa [#allocation7], 0
    // Predicated region
    $region2: #{tpu_custom_call.1} parent=1 // pred_check
      _
    $region3: #{tpu_custom_call.1} parent=1 // pred_check_branch
      %13 = sbr.rel (0) target = $region5
    $region4: #{tpu_custom_call.1} parent=1 // pred_region
      _
    $region5: #{tpu_custom_call.1} parent=1 // pred_fallthru
      _
    // Predicated region
    $region6: #{tpu_custom_call.1} parent=1 // pred_check
      _
    $region7: #{tpu_custom_call.1} parent=1 // pred_check_branch
      %15 = sbr.rel (0) target = $region9
    $region8: #{tpu_custom_call.1} parent=1 // pred_region
      %17 = vsyncadd [#allocation3], 0
      %s18 = sshll.u32 %s1, 4
      %s19 = int_to_ptr.hbm [resolvable:$true] %s18
      %s20 = sshll.u32 [#allocation2], 4
      %s21 = int_to_ptr.vmem [resolvable:$true] %s20
      %26 = dma.hbm_to_vmem [thread:$0]  %s19, 256, %s21, [#allocation3], 32, 32, 2
    $region9: #{tpu_custom_call.1} parent=1 // pred_fallthru
      _
    // Predicated region
    $region10: #{tpu_custom_call.1} parent=1 // pred_check
      _
    $region11: #{tpu_custom_call.1} parent=1 // pred_check_branch
      %28 = sbr.rel (0) target = $region13
    $region12: #{tpu_custom_call.1} parent=1 // pred_region
      %30 = dma.done [#allocation3], 256
    $region13: #{tpu_custom_call.1} parent=1 // pred_fallthru
      _
    %s31 = smul.u32 0, 2
    %v32 = vld [vmem:[#allocation2] sm:$0x3]
    %v33 = vld [vmem:[#allocation2 + $0x2] sm:$0x3]
    %v34 = vld [vmem:[#allocation2 + $0x4] sm:$0x3]
    %v35 = vld [vmem:[#allocation2 + $0x6] sm:$0x3]
    %v36 = vld [vmem:[#allocation2 + $0x8] sm:$0x3]
    %v37 = vld [vmem:[#allocation2 + $0xa] sm:$0x3]
    %v38 = vld [vmem:[#allocation2 + $0xc] sm:$0x3]
    %v39 = vld [vmem:[#allocation2 + $0xe] sm:$0x3]
    %v40 = vlaneseq
    %v41 = vand.u32 %v40, 127
    %vm42 = vcmp.lt.s32.totalorder %v41, 32
    %v43 = vsel %vm42, 1, 0
    %vm44 = vcmp.eq.s32.totalorder %v43, 1
    %v45 = vsel %vm44, %v32, -inf
    %v46 = vsel %vm44, %v33, -inf
    %v47 = vsel %vm44, %v34, -inf
    %v48 = vsel %vm44, %v35, -inf
    %v49 = vsel %vm44, %v36, -inf
    %v50 = vsel %vm44, %v37, -inf
    %v51 = vsel %vm44, %v38, -inf
    %v52 = vsel %vm44, %v39, -inf
    %vm53 = vcmask 320512
    %v54 = vsel %vm53, %v45, -inf
    %55 = vmax.xlane.f32.xlu0 %v54
    %v56 = vpop.xlane.xlu0 %55
    %v57 = vsel %vm53, %v46, -inf
    %58 = vmax.xlane.f32.xlu0 %v57
    %v59 = vpop.xlane.xlu0 %58
    %v60 = vsel %vm53, %v47, -inf
    %61 = vmax.xlane.f32.xlu0 %v60
    %v62 = vpop.xlane.xlu0 %61
    %v63 = vsel %vm53, %v48, -inf
    %64 = vmax.xlane.f32.xlu0 %v63
    %v65 = vpop.xlane.xlu0 %64
    %v66 = vsel %vm53, %v49, -inf
    %67 = vmax.xlane.f32.xlu0 %v66
    %v68 = vpop.xlane.xlu0 %67
    %v69 = vsel %vm53, %v50, -inf
    %70 = vmax.xlane.f32.xlu0 %v69
    %v71 = vpop.xlane.xlu0 %70
    %v72 = vsel %vm53, %v51, -inf
    %73 = vmax.xlane.f32.xlu0 %v72
    %v74 = vpop.xlane.xlu0 %73
    %v75 = vsel %vm53, %v52, -inf
    %76 = vmax.xlane.f32.xlu0 %v75
    %v77 = vpop.xlane.xlu0 %76
    %v78 = vsub.f32 %v45, %v56
    %v79 = vsub.f32 %v46, %v59
    %v80 = vsub.f32 %v47, %v62
    %v81 = vsub.f32 %v48, %v65
    %v82 = vsub.f32 %v49, %v68
    %v83 = vsub.f32 %v50, %v71
    %v84 = vsub.f32 %v51, %v74
    %v85 = vsub.f32 %v52, %v77
    %v86 = vmul.f32 %v78, 16.0
    %v87 = vmul.f32 %v79, 16.0
    %v88 = vmul.f32 %v80, 16.0
    %v89 = vmul.f32 %v81, 16.0
    %v90 = vmul.f32 %v82, 16.0
    %v91 = vmul.f32 %v83, 16.0
    %v92 = vmul.f32 %v84, 16.0
    %v93 = vmul.f32 %v85, 16.0
    %v94 = vmul.f32 %v86, 1.442695
    %v95 = vpow.pop %v94
    %v96 = vmul.f32 %v87, 1.442695
    %v97 = vpow.pop %v96
    %v98 = vmul.f32 %v88, 1.442695
    %v99 = vpow.pop %v98
    %v100 = vmul.f32 %v89, 1.442695
    %v101 = vpow.pop %v100
    %v102 = vmul.f32 %v90, 1.442695
    %v103 = vpow.pop %v102
    %v104 = vmul.f32 %v91, 1.442695
    %v105 = vpow.pop %v104
    %v106 = vmul.f32 %v92, 1.442695
    %v107 = vpow.pop %v106
    %v108 = vmul.f32 %v93, 1.442695
    %v109 = vpow.pop %v108
    %v110 = vsel %vm53, %v95, 0.0
    %111 = vadd.xlane.f32.xlu0 %v110
    %v112 = vpop.xlane.xlu0 %111
    %v113 = vsel %vm53, %v97, 0.0
    %114 = vadd.xlane.f32.xlu0 %v113
    %v115 = vpop.xlane.xlu0 %114
    %v116 = vsel %vm53, %v99, 0.0
    %117 = vadd.xlane.f32.xlu0 %v116
    %v118 = vpop.xlane.xlu0 %117
    %v119 = vsel %vm53, %v101, 0.0
    %120 = vadd.xlane.f32.xlu0 %v119
    %v121 = vpop.xlane.xlu0 %120
    %v122 = vsel %vm53, %v103, 0.0
    %123 = vadd.xlane.f32.xlu0 %v122
    %v124 = vpop.xlane.xlu0 %123
    %v125 = vsel %vm53, %v105, 0.0
    %126 = vadd.xlane.f32.xlu0 %v125
    %v127 = vpop.xlane.xlu0 %126
    %v128 = vsel %vm53, %v107, 0.0
    %129 = vadd.xlane.f32.xlu0 %v128
    %v130 = vpop.xlane.xlu0 %129
    %v131 = vsel %vm53, %v109, 0.0
    %132 = vadd.xlane.f32.xlu0 %v131
    %v133 = vpop.xlane.xlu0 %132
    %v134 = vlog2.pop %v112
    %v135 = vmul.f32 %v134, 0.6931472
    %v136 = vlog2.pop %v115
    %v137 = vmul.f32 %v136, 0.6931472
    %v138 = vlog2.pop %v118
    %v139 = vmul.f32 %v138, 0.6931472
    %v140 = vlog2.pop %v121
    %v141 = vmul.f32 %v140, 0.6931472
    %v142 = vlog2.pop %v124
    %v143 = vmul.f32 %v142, 0.6931472
    %v144 = vlog2.pop %v127
    %v145 = vmul.f32 %v144, 0.6931472
    %v146 = vlog2.pop %v130
    %v147 = vmul.f32 %v146, 0.6931472
    %v148 = vlog2.pop %v133
    %v149 = vmul.f32 %v148, 0.6931472
    %v150 = vmul.f32 %v56, 16.0
    %v151 = vmul.f32 %v59, 16.0
    %v152 = vmul.f32 %v62, 16.0
    %v153 = vmul.f32 %v65, 16.0
    %v154 = vmul.f32 %v68, 16.0
    %v155 = vmul.f32 %v71, 16.0
    %v156 = vmul.f32 %v74, 16.0
    %v157 = vmul.f32 %v77, 16.0
    %v158 = vadd.f32 %v135, %v150
    %v159 = vadd.f32 %v137, %v151
    %v160 = vadd.f32 %v139, %v152
    %v161 = vadd.f32 %v141, %v153
    %v162 = vadd.f32 %v143, %v154
    %v163 = vadd.f32 %v145, %v155
    %v164 = vadd.f32 %v147, %v156
    %v165 = vadd.f32 %v149, %v157
    %v166 = vld [vmem:[%s0] sm:$0xff]
    %v167 = vrot.slane %v166, 1
    %v168 = vrot.slane %v166, 2
    %v169 = vrot.slane %v166, 3
    %v170 = vrot.slane %v166, 4
    %v171 = vrot.slane %v166, 5
    %v172 = vrot.slane %v166, 6
    %v173 = vrot.slane %v166, 7
    %174 = vset.pattern.permute.xlu0 0
    %175 = vperm.xlu0 %174, %v166
    %v176 = vpop.permute.xlu0 %175
    %v177 = vperm.slane %v176, 0
    %178 = vset.pattern.permute.xlu0 0
    %179 = vperm.xlu0 %178, %v167
    %v180 = vpop.permute.xlu0 %179
    %v181 = vperm.slane %v180, 0
    %182 = vset.pattern.permute.xlu0 0
    %183 = vperm.xlu0 %182, %v168
    %v184 = vpop.permute.xlu0 %183
    %v185 = vperm.slane %v184, 0
    %186 = vset.pattern.permute.xlu0 0
    %187 = vperm.xlu0 %186, %v169
    %v188 = vpop.permute.xlu0 %187
    %v189 = vperm.slane %v188, 0
    %190 = vset.pattern.permute.xlu0 0
    %191 = vperm.xlu0 %190, %v170
    %v192 = vpop.permute.xlu0 %191
    %v193 = vperm.slane %v192, 0
    %194 = vset.pattern.permute.xlu0 0
    %195 = vperm.xlu0 %194, %v171
    %v196 = vpop.permute.xlu0 %195
    %v197 = vperm.slane %v196, 0
    %198 = vset.pattern.permute.xlu0 0
    %199 = vperm.xlu0 %198, %v172
    %v200 = vpop.permute.xlu0 %199
    %v201 = vperm.slane %v200, 0
    %202 = vset.pattern.permute.xlu0 0
    %203 = vperm.xlu0 %202, %v173
    %v204 = vpop.permute.xlu0 %203
    %v205 = vperm.slane %v204, 0
    %vm206 = vcmp.eq.s32.totalorder %v41, %v177
    %vm207 = vcmp.eq.s32.totalorder %v41, %v181
    %vm208 = vcmp.eq.s32.totalorder %v41, %v185
    %vm209 = vcmp.eq.s32.totalorder %v41, %v189
    %vm210 = vcmp.eq.s32.totalorder %v41, %v193
    %vm211 = vcmp.eq.s32.totalorder %v41, %v197
    %vm212 = vcmp.eq.s32.totalorder %v41, %v201
    %vm213 = vcmp.eq.s32.totalorder %v41, %v205
    %v214 = vsel %vm206, 1, 0
    %v215 = vsel %vm207, 1, 0
    %v216 = vsel %vm208, 1, 0
    %v217 = vsel %vm209, 1, 0
    %v218 = vsel %vm210, 1, 0
    %v219 = vsel %vm211, 1, 0
    %v220 = vsel %vm212, 1, 0
    %v221 = vsel %vm213, 1, 0
    %vm222 = vcmp.eq.s32.totalorder %v214, 1
    %vm223 = vcmp.eq.s32.totalorder %v215, 1
    %vm224 = vcmp.eq.s32.totalorder %v216, 1
    %vm225 = vcmp.eq.s32.totalorder %v217, 1
    %vm226 = vcmp.eq.s32.totalorder %v218, 1
    %vm227 = vcmp.eq.s32.totalorder %v219, 1
    %vm228 = vcmp.eq.s32.totalorder %v220, 1
    %vm229 = vcmp.eq.s32.totalorder %v221, 1
    %v230 = vsel %vm222, %v32, 0.0
    %v231 = vsel %vm223, %v33, 0.0
    %v232 = vsel %vm224, %v34, 0.0
    %v233 = vsel %vm225, %v35, 0.0
    %v234 = vsel %vm226, %v36, 0.0
    %v235 = vsel %vm227, %v37, 0.0
    %v236 = vsel %vm228, %v38, 0.0
    %v237 = vsel %vm229, %v39, 0.0
    %v238 = vsel %vm53, %v230, 0.0
    %239 = vadd.xlane.f32.xlu0 %v238
    %v240 = vpop.xlane.xlu0 %239
    %v241 = vsel %vm53, %v231, 0.0
    %242 = vadd.xlane.f32.xlu0 %v241
    %v243 = vpop.xlane.xlu0 %242
    %v244 = vsel %vm53, %v232, 0.0
    %245 = vadd.xlane.f32.xlu0 %v244
    %v246 = vpop.xlane.xlu0 %245
    %v247 = vsel %vm53, %v233, 0.0
    %248 = vadd.xlane.f32.xlu0 %v247
    %v249 = vpop.xlane.xlu0 %248
    %v250 = vsel %vm53, %v234, 0.0
    %251 = vadd.xlane.f32.xlu0 %v250
    %v252 = vpop.xlane.xlu0 %251
    %v253 = vsel %vm53, %v235, 0.0
    %254 = vadd.xlane.f32.xlu0 %v253
    %v255 = vpop.xlane.xlu0 %254
    %v256 = vsel %vm53, %v236, 0.0
    %257 = vadd.xlane.f32.xlu0 %v256
    %v258 = vpop.xlane.xlu0 %257
    %v259 = vsel %vm53, %v237, 0.0
    %260 = vadd.xlane.f32.xlu0 %v259
    %v261 = vpop.xlane.xlu0 %260
    %v262 = vmul.f32 %v240, 16.0
    %v263 = vmul.f32 %v243, 16.0
    %v264 = vmul.f32 %v246, 16.0
    %v265 = vmul.f32 %v249, 16.0
    %v266 = vmul.f32 %v252, 16.0
    %v267 = vmul.f32 %v255, 16.0
    %v268 = vmul.f32 %v258, 16.0
    %v269 = vmul.f32 %v261, 16.0
    %v270 = vsub.f32 %v158, %v262
    %v271 = vsub.f32 %v159, %v263
    %v272 = vsub.f32 %v160, %v264
    %v273 = vsub.f32 %v161, %v265
    %v274 = vsub.f32 %v162, %v266
    %v275 = vsub.f32 %v163, %v267
    %v276 = vsub.f32 %v164, %v268
    %v277 = vsub.f32 %v165, %v269
    %vm278 = vcmp.eq.f32.partialorder %v240, %v56
    %vm279 = vcmp.eq.f32.partialorder %v243, %v59
    %vm280 = vcmp.eq.f32.partialorder %v246, %v62
    %vm281 = vcmp.eq.f32.partialorder %v249, %v65
    %vm282 = vcmp.eq.f32.partialorder %v252, %v68
    %vm283 = vcmp.eq.f32.partialorder %v255, %v71
    %vm284 = vcmp.eq.f32.partialorder %v258, %v74
    %vm285 = vcmp.eq.f32.partialorder %v261, %v77
    %v286 = vsel %vm278, 1, 0
    %v287 = vsel %vm279, 1, 0
    %v288 = vsel %vm280, 1, 0
    %v289 = vsel %vm281, 1, 0
    %v290 = vsel %vm282, 1, 0
    %v291 = vsel %vm283, 1, 0
    %v292 = vsel %vm284, 1, 0
    %v293 = vsel %vm285, 1, 0
    %v294 = vcvt.s32.f32 %v286
    %v295 = vcvt.s32.f32 %v287
    %v296 = vcvt.s32.f32 %v288
    %v297 = vcvt.s32.f32 %v289
    %v298 = vcvt.s32.f32 %v290
    %v299 = vcvt.s32.f32 %v291
    %v300 = vcvt.s32.f32 %v292
    %v301 = vcvt.s32.f32 %v293
    %v302 = vlaneseq
    %v303 = vshrl.u32 %v302, 7
    %v304 = vstv %s31
    %v305 = vadd.s32 %v304, %v303
    %vm306 = vcmp.lt.s32.totalorder %v305, 2
    %v307 = vsel %vm306, 1, 0
    %vm308 = vcmp.eq.s32.totalorder %v307, 1
    %v309 = vsel %vm308, %v270, 0.0
    %v310 = vsel %vm308, %v271, 0.0
    %v311 = vsel %vm308, %v272, 0.0
    %v312 = vsel %vm308, %v273, 0.0
    %v313 = vsel %vm308, %v274, 0.0
    %v314 = vsel %vm308, %v275, 0.0
    %v315 = vsel %vm308, %v276, 0.0
    %v316 = vsel %vm308, %v277, 0.0
    %v317 = vsel %vm308, %v294, 0.0
    %v318 = vsel %vm308, %v295, 0.0
    %v319 = vsel %vm308, %v296, 0.0
    %v320 = vsel %vm308, %v297, 0.0
    %v321 = vsel %vm308, %v298, 0.0
    %v322 = vsel %vm308, %v299, 0.0
    %v323 = vsel %vm308, %v300, 0.0
    %v324 = vsel %vm308, %v301, 0.0
    %vm325 = vcmask 1041408
    %v326 = vsel %vm325, %v309, 0.0
    %v327 = vrot.slane %v326, 4
    %v328 = vadd.f32 %v326, %v327
    %v329 = vrot.slane %v328, 2
    %v330 = vadd.f32 %v328, %v329
    %v331 = vrot.slane %v330, 1
    %v332 = vadd.f32 %v330, %v331
    %v333 = vsel %vm325, %v310, 0.0
    %v334 = vrot.slane %v333, 4
    %v335 = vadd.f32 %v333, %v334
    %v336 = vrot.slane %v335, 2
    %v337 = vadd.f32 %v335, %v336
    %v338 = vrot.slane %v337, 1
    %v339 = vadd.f32 %v337, %v338
    %v340 = vsel %vm325, %v311, 0.0
    %v341 = vrot.slane %v340, 4
    %v342 = vadd.f32 %v340, %v341
    %v343 = vrot.slane %v342, 2
    %v344 = vadd.f32 %v342, %v343
    %v345 = vrot.slane %v344, 1
    %v346 = vadd.f32 %v344, %v345
    %v347 = vsel %vm325, %v312, 0.0
    %v348 = vrot.slane %v347, 4
    %v349 = vadd.f32 %v347, %v348
    %v350 = vrot.slane %v349, 2
    %v351 = vadd.f32 %v349, %v350
    %v352 = vrot.slane %v351, 1
    %v353 = vadd.f32 %v351, %v352
    %v354 = vsel %vm325, %v313, 0.0
    %v355 = vrot.slane %v354, 4
    %v356 = vadd.f32 %v354, %v355
    %v357 = vrot.slane %v356, 2
    %v358 = vadd.f32 %v356, %v357
    %v359 = vrot.slane %v358, 1
    %v360 = vadd.f32 %v358, %v359
    %v361 = vsel %vm325, %v314, 0.0
    %v362 = vrot.slane %v361, 4
    %v363 = vadd.f32 %v361, %v362
    %v364 = vrot.slane %v363, 2
    %v365 = vadd.f32 %v363, %v364
    %v366 = vrot.slane %v365, 1
    %v367 = vadd.f32 %v365, %v366
    %v368 = vsel %vm325, %v315, 0.0
    %v369 = vrot.slane %v368, 4
    %v370 = vadd.f32 %v368, %v369
    %v371 = vrot.slane %v370, 2
    %v372 = vadd.f32 %v370, %v371
    %v373 = vrot.slane %v372, 1
    %v374 = vadd.f32 %v372, %v373
    %v375 = vsel %vm325, %v316, 0.0
    %v376 = vrot.slane %v375, 4
    %v377 = vadd.f32 %v375, %v376
    %v378 = vrot.slane %v377, 2
    %v379 = vadd.f32 %v377, %v378
    %v380 = vrot.slane %v379, 1
    %v381 = vadd.f32 %v379, %v380
    %v382 = vadd.f32 %v332, %v339
    %v383 = vadd.f32 %v382, %v346
    %v384 = vadd.f32 %v383, %v353
    %v385 = vadd.f32 %v384, %v360
    %v386 = vadd.f32 %v385, %v367
    %v387 = vadd.f32 %v386, %v374
    %v388 = vadd.f32 %v387, %v381
    %vm389 = vcmask 0
    %390 = vst.msk [vmem:[#allocation5] sm:$0x1] %vm389, %v388
    %v391 = vsel %vm325, %v317, 0.0
    %v392 = vrot.slane %v391, 4
    %v393 = vadd.f32 %v391, %v392
    %v394 = vrot.slane %v393, 2
    %v395 = vadd.f32 %v393, %v394
    %v396 = vrot.slane %v395, 1
    %v397 = vadd.f32 %v395, %v396
    %v398 = vsel %vm325, %v318, 0.0
    %v399 = vrot.slane %v398, 4
    %v400 = vadd.f32 %v398, %v399
    %v401 = vrot.slane %v400, 2
    %v402 = vadd.f32 %v400, %v401
    %v403 = vrot.slane %v402, 1
    %v404 = vadd.f32 %v402, %v403
    %v405 = vsel %vm325, %v319, 0.0
    %v406 = vrot.slane %v405, 4
    %v407 = vadd.f32 %v405, %v406
    %v408 = vrot.slane %v407, 2
    %v409 = vadd.f32 %v407, %v408
    %v410 = vrot.slane %v409, 1
    %v411 = vadd.f32 %v409, %v410
    %v412 = vsel %vm325, %v320, 0.0
    %v413 = vrot.slane %v412, 4
    %v414 = vadd.f32 %v412, %v413
    %v415 = vrot.slane %v414, 2
    %v416 = vadd.f32 %v414, %v415
    %v417 = vrot.slane %v416, 1
    %v418 = vadd.f32 %v416, %v417
    %v419 = vsel %vm325, %v321, 0.0
    %v420 = vrot.slane %v419, 4
    %v421 = vadd.f32 %v419, %v420
    %v422 = vrot.slane %v421, 2
    %v423 = vadd.f32 %v421, %v422
    %v424 = vrot.slane %v423, 1
    %v425 = vadd.f32 %v423, %v424
    %v426 = vsel %vm325, %v322, 0.0
    %v427 = vrot.slane %v426, 4
    %v428 = vadd.f32 %v426, %v427
    %v429 = vrot.slane %v428, 2
    %v430 = vadd.f32 %v428, %v429
    %v431 = vrot.slane %v430, 1
    %v432 = vadd.f32 %v430, %v431
    %v433 = vsel %vm325, %v323, 0.0
    %v434 = vrot.slane %v433, 4
    %v435 = vadd.f32 %v433, %v434
    %v436 = vrot.slane %v435, 2
    %v437 = vadd.f32 %v435, %v436
    %v438 = vrot.slane %v437, 1
    %v439 = vadd.f32 %v437, %v438
    %v440 = vsel %vm325, %v324, 0.0
    %v441 = vrot.slane %v440, 4
    %v442 = vadd.f32 %v440, %v441
    %v443 = vrot.slane %v442, 2
    %v444 = vadd.f32 %v442, %v443
    %v445 = vrot.slane %v444, 1
    %v446 = vadd.f32 %v444, %v445
    %v447 = vadd.f32 %v397, %v404
    %v448 = vadd.f32 %v447, %v411
    %v449 = vadd.f32 %v448, %v418
    %v450 = vadd.f32 %v449, %v425
    %v451 = vadd.f32 %v450, %v432
    %v452 = vadd.f32 %v451, %v439
    %v453 = vadd.f32 %v452, %v446
    %454 = vst.msk [vmem:[#allocation6] sm:$0x1] %vm389, %v453
    // Predicated region
    $region14: #{tpu_custom_call.1} parent=1 // pred_check
      _
    $region15: #{tpu_custom_call.1} parent=1 // pred_check_branch
      %456 = sbr.rel (0) target = $region17
    $region16: #{tpu_custom_call.1} parent=1 // pred_region
      %458 = vsyncadd [#allocation4], 0
      %s460 = sshll.u32 [#allocation5], 4
      %s461 = int_to_ptr.vmem [resolvable:$true] %s460
      %s462 = sshll.u32 %s2, 4
      %s463 = int_to_ptr.hbm [resolvable:$true] %s462
      %465 = dma.vmem_to_hbm [thread:$0]  %s461, 16, %s463, [#allocation4]
    $region17: #{tpu_custom_call.1} parent=1 // pred_fallthru
      _
    // Predicated region
    $region18: #{tpu_custom_call.1} parent=1 // pred_check
      _
    $region19: #{tpu_custom_call.1} parent=1 // pred_check_branch
      %467 = sbr.rel (0) target = $region21
    $region20: #{tpu_custom_call.1} parent=1 // pred_region
      %469 = vsyncadd [#allocation7], 0
      %s471 = sshll.u32 [#allocation6], 4
      %s472 = int_to_ptr.vmem [resolvable:$true] %s471
      %s473 = sshll.u32 %s3, 4
      %s474 = int_to_ptr.hbm [resolvable:$true] %s473
      %476 = dma.vmem_to_hbm [thread:$0]  %s472, 16, %s474, [#allocation7]
    $region21: #{tpu_custom_call.1} parent=1 // pred_fallthru
      _
    // Predicated region
    $region22: #{tpu_custom_call.1} parent=1 // pred_check
      _
    $region23: #{tpu_custom_call.1} parent=1 // pred_check_branch
      %478 = sbr.rel (0) target = $region25
    $region24: #{tpu_custom_call.1} parent=1 // pred_region
      %480 = dma.done [#allocation4], 16
    $region25: #{tpu_custom_call.1} parent=1 // pred_fallthru
      _
    // Predicated region
    $region26: #{tpu_custom_call.1} parent=1 // pred_check
      _
    $region27: #{tpu_custom_call.1} parent=1 // pred_check_branch
      %482 = sbr.rel (0) target = $region29
    $region28: #{tpu_custom_call.1} parent=1 // pred_region
      %484 = dma.done [#allocation7], 16
    $region29: #{tpu_custom_call.1} parent=1 // pred_fallthru
      _
    %485 = vsyncpa [#allocation3], 1
    %486 = vsyncpa [#allocation4], 1
    %487 = vsyncpa [#allocation7], 1

</llo_original>
